<compile_context>
chip_gen: v7x
topology: tpu7x:2x2x1
jax: 0.10.0
libtpu: 0.0.40
codegen_flags: <defaults>
</compile_context>

<pallas_src>
import functools

import jax
import jax.numpy as jnp
from jax import lax
from jax.experimental import pallas as pl
from jax.experimental.pallas import tpu as pltpu


def _round_up(x, m):
    return (x + m - 1) // m * m


def _mm_nt(a, b):
    # a: [M, D], b: [N, D] -> [M, N], contracting D on the MXU, f32 accumulate.
    return lax.dot_general(a, b, (((1,), (1,)), ((), ())),
                           preferred_element_type=jnp.float32)


def lgm_kernel(feat_ref, centers_ref, log_covs_ref, label_ref,
               logits_ref, margin_logits_ref, lik_ref,
               *, alpha, c_pad, mxu_dtype):
    feat = feat_ref[...].astype(jnp.float32)           # [TB, D]
    centers = centers_ref[...].astype(jnp.float32)     # [C_pad, D]
    log_covs = log_covs_ref[...].astype(jnp.float32)   # [C_pad, D]
    label = label_ref[...]                              # [TB, 1] int32 (-1 = pad)

    tb, d = feat.shape

    inv_covs = jnp.exp(-log_covs)                       # 1 / covs   (EUP)
    cic = centers * inv_covs
    csq = centers * centers
    feat_sq = feat * feat

    # --- per-class constant rows, ONE M=1 MXU push: [1, 3*C_pad] ------------
    #     [ sum_d c^2/cov  |  sum_d log_cov  |  sum_d c^2 ]
    ones_row = jnp.ones((1, d), mxu_dtype)
    rows_rhs = jnp.concatenate([csq * inv_covs, log_covs, csq], axis=0)
    rows = _mm_nt(ones_row, rows_rhs.astype(mxu_dtype))            # [1, 3*C_pad]
    t2 = rows[:, :c_pad]                    # sum_d centers^2 / covs
    slog = rows[:, c_pad:2 * c_pad]         # sum_d log_covs
    c2 = rows[:, 2 * c_pad:]                # sum_d centers^2

    # --- fused feat-lhs matmul: [TB, 2*C_pad] = [ feat@(c/cov)^T | feat@c^T ]
    feat_rhs = jnp.concatenate([cic, centers], axis=0)             # [2*C_pad, D]
    tf = _mm_nt(feat.astype(mxu_dtype), feat_rhs.astype(mxu_dtype))
    t3 = tf[:, :c_pad]
    fc = tf[:, c_pad:]

    # --- remaining batch-scaled matmul (different lhs): feat^2 @ (1/cov)^T ---
    t1 = _mm_nt(feat_sq.astype(mxu_dtype), inv_covs.astype(mxu_dtype))

    # Mahalanobis-style distance; clamp the expanded form at 0 (cancellation).
    dist = jnp.maximum(t1 + t2 - 2.0 * t3, 0.0)                    # [TB, C_pad]

    class_ids = lax.broadcasted_iota(jnp.int32, (tb, c_pad), 1)
    mask = (class_ids == label).astype(jnp.float32)                # [TB, C_pad]
    y_onehot = 1.0 + alpha * mask

    # slog is a [1, C_pad] row: broadcast-add over sublanes (cheap VPU work).
    logits_ref[...] = (-0.5 * (slog + dist)).astype(logits_ref.dtype)
    margin_logits_ref[...] = (-0.5 * (slog + dist * y_onehot)
                              ).astype(margin_logits_ref.dtype)

    # --- per-tile likelihood partial -----------------------------------------
    # cdist = 0.5 * sum_b ||feat_b - centers[label_b]||^2, rebuilt from the
    # already-computed f2 / c2 / fc pieces (no extra [TB, C_pad] sqdist tile).
    # Padded batch rows have feat == 0 and mask == 0, so they contribute 0.
    f2_sum = jnp.sum(feat_sq, keepdims=True)                       # (1, 1)
    cdist = 0.5 * (f2_sum + jnp.sum(mask * c2, keepdims=True)
                   - 2.0 * jnp.sum(mask * fc, keepdims=True))
    cdist = jnp.maximum(cdist, 0.0)
    reg = 0.5 * jnp.sum(mask * slog, keepdims=True)                # (1, 1)
    lik_ref[...] = (cdist + reg).reshape(1, 1, 1).astype(lik_ref.dtype)


def _pick_batch_tile(batch, d, c_pad):
    """Largest batch tile whose double-buffered working set stays within a
    conservative, generation-aware VMEM budget (v7x: 64 MiB physical VMEM vs
    128 MiB on v5e/v6e -> roughly half the tile)."""
    try:
        vmem_bytes = pltpu.get_tpu_info().vmem_capacity_bytes
    except Exception:  # info unavailable (e.g. interpret mode) -> conservative
        vmem_bytes = 64 * 1024 * 1024
    budget = min(vmem_bytes // 8, 16 * 1024 * 1024)
    # resident class tables (x2 buffers) + in-kernel rhs concatenations
    fixed = 4 * (4 * c_pad * d + 5 * c_pad * d)
    # feat tile (x2 buffers) + two f32 output tiles (x2 buffers) + live
    # intermediates (feat_sq, tf, t1, dist, mask, ...)
    per_row = 4 * (4 * d + 12 * c_pad)
    tb = (budget - fixed) // max(per_row, 1)
    tb = max(8, min(int(tb), 1024, _round_up(batch, 8)))
    return (tb // 8) * 8


def lgm_loss_pallas(feat, label, centers, log_covs, alpha,
                    *, mxu_dtype=jnp.float32):
    """LGM forward pass.  Set mxu_dtype=jnp.bfloat16 on v6e/v7x for ~2-4x MXU
    throughput when MXU-bound (costs precision on the feat^2 @ 1/cov term;
    re-validate tolerance before enabling)."""
    B, D = feat.shape
    C = centers.shape[0]

    C_pad = _round_up(C, 128)           # lane-dense [B, C] tiles / MXU columns
    tb = _pick_batch_tile(B, D, C_pad)
    B_pad = _round_up(B, tb)
    num_tiles = B_pad // tb

    feat_p = jnp.pad(feat.astype(jnp.float32), ((0, B_pad - B), (0, 0)))
    centers_p = jnp.pad(centers.astype(jnp.float32), ((0, C_pad - C), (0, 0)))
    log_covs_p = jnp.pad(log_covs.astype(jnp.float32), ((0, C_pad - C), (0, 0)))
    # padded batch rows get label -1 -> all-zero one-hot -> no likelihood term
    label_p = jnp.pad(label.astype(jnp.int32).reshape(B, 1),
                      ((0, B_pad - B), (0, 0)), constant_values=-1)

    kernel = functools.partial(lgm_kernel, alpha=float(alpha), c_pad=C_pad,
                               mxu_dtype=mxu_dtype)

    cost = pl.CostEstimate(
        flops=6 * B_pad * C_pad * D + 6 * num_tiles * C_pad * D,
        transcendentals=num_tiles * C_pad * D,
        bytes_accessed=4 * (B_pad * D + 2 * C_pad * D
                            + 2 * B_pad * C_pad + B_pad + num_tiles),
    )

    logits, margin_logits, lik_parts = pl.pallas_call(
        kernel,
        grid=(num_tiles,),
        in_specs=[
            pl.BlockSpec((tb, D), lambda i: (i, 0)),        # feat (streamed)
            pl.BlockSpec((C_pad, D), lambda i: (0, 0)),     # centers (resident)
            pl.BlockSpec((C_pad, D), lambda i: (0, 0)),     # log_covs (resident)
            pl.BlockSpec((tb, 1), lambda i: (i, 0)),        # labels (per tile)
        ],
        out_specs=[
            pl.BlockSpec((tb, C_pad), lambda i: (i, 0)),    # logits
            pl.BlockSpec((tb, C_pad), lambda i: (i, 0)),    # margin_logits
            pl.BlockSpec((1, 1, 1), lambda i: (i, 0, 0)),   # likelihood partial
        ],
        out_shape=[
            jax.ShapeDtypeStruct((B_pad, C_pad), jnp.float32),
            jax.ShapeDtypeStruct((B_pad, C_pad), jnp.float32),
            jax.ShapeDtypeStruct((num_tiles, 1, 1), jnp.float32),
        ],
        compiler_params=pltpu.CompilerParams(
            dimension_semantics=("parallel",)),
        cost_estimate=cost,
    )(feat_p, centers_p, log_covs_p, label_p)

    likelihood = jnp.sum(lik_parts) / B
    return logits[:B, :C], margin_logits[:B, :C], likelihood


def lgm_loss_ref(feat, label, centers, log_covs, alpha):
    # Pure-JAX reference mirroring the PyTorch forward exactly.
    B = feat.shape[0]
    C = centers.shape[0]
    covs = jnp.exp(log_covs)
    diff = feat[:, None, :] - centers[None, :, :]
    dist = jnp.sum(diff * diff / covs[None, :, :], axis=-1)
    y_onehot = 1.0 + alpha * jax.nn.one_hot(label, C, dtype=jnp.float32)
    slog = jnp.sum(log_covs, axis=-1)
    margin_logits = -0.5 * (slog[None, :] + dist * y_onehot)
    logits = -0.5 * (slog[None, :] + dist)
    cdiff = feat - centers[label]
    cdist = jnp.sum(cdiff * cdiff) / 2.0
    reg = 0.5 * jnp.sum(slog[label])
    likelihood = (cdist + reg) / B
    return logits, margin_logits, likelihood


if __name__ == "__main__":
    # Small, deterministic setup consistent with LGMLoss(num_classes, feat_dim, alpha)
    batch_size, num_classes, feat_dim, alpha = 8, 10, 32, 0.1

    key = jax.random.PRNGKey(0)
    k_feat, k_ctr, k_cov, k_lab = jax.random.split(key, 4)

    feat = jax.random.normal(k_feat, (batch_size, feat_dim), jnp.float32)
    label = jax.random.randint(k_lab, (batch_size,), 0, num_classes, jnp.int32)

    # Parameters: centers ~ randn (as in __init__); log_covs is zeros in
    # __init__ — perturbed deterministically here so the covariance path is
    # numerically exercised.
    centers = jax.random.normal(k_ctr, (num_classes, feat_dim), jnp.float32)
    log_covs = 0.1 * jax.random.normal(k_cov, (num_classes, feat_dim), jnp.float32)

    logits, margin_logits, likelihood = jax.block_until_ready(
        lgm_loss_pallas(feat, label, centers, log_covs, alpha))

    logits_r, margin_logits_r, likelihood_r = lgm_loss_ref(
        feat, label, centers, log_covs, alpha)

    assert jnp.allclose(logits, logits_r, atol=1e-3, rtol=1e-4)
    assert jnp.allclose(margin_logits, margin_logits_r, atol=1e-3, rtol=1e-4)
    assert jnp.allclose(likelihood, likelihood_r, atol=1e-3, rtol=1e-4)

    print("KERNEL_OK")
</pallas_src>

<mosaic_0001>
module attributes {stable_mosaic.version = 11 : i64} {
  func.func @lgm_kernel(%arg0: i32, %arg1: memref<8x32xf32, #tpu.memory_space<vmem>>, %arg2: memref<128x32xf32, #tpu.memory_space<vmem>>, %arg3: memref<128x32xf32, #tpu.memory_space<vmem>>, %arg4: memref<8x1xi32, #tpu.memory_space<vmem>>, %arg5: memref<8x128xf32, #tpu.memory_space<vmem>>, %arg6: memref<8x128xf32, #tpu.memory_space<vmem>>, %arg7: memref<1x1x1xf32, #tpu.memory_space<vmem>>) attributes {dimension_semantics = [#tpu.dimension_semantics<parallel>], iteration_bounds = array<i64: 1>, scalar_prefetch = 0 : i64, scratch_operands = 0 : i64, tpu.core_type = #tpu.core_type<tc>, window_params = [{transform_indices = @transform_0, window_bounds = array<i64: 8, 32>}, {pipeline_mode = #tpu.pipeline_mode<synchronous>, transform_indices = @transform_1, window_bounds = array<i64: 128, 32>}, {pipeline_mode = #tpu.pipeline_mode<synchronous>, transform_indices = @transform_2, window_bounds = array<i64: 128, 32>}, {transform_indices = @transform_3, window_bounds = array<i64: 8, 1>}, {transform_indices = @transform_4, window_bounds = array<i64: 8, 128>}, {transform_indices = @transform_5, window_bounds = array<i64: 8, 128>}, {transform_indices = @transform_6, window_bounds = array<i64: 1, 1, 1>}]} {
    %c0 = arith.constant 0 : index
    %c0_0 = arith.constant 0 : index
    %0 = vector.load %arg1[%c0, %c0_0] : memref<8x32xf32, #tpu.memory_space<vmem>>, vector<8x32xf32>
    %c0_1 = arith.constant 0 : index
    %c0_2 = arith.constant 0 : index
    %1 = vector.load %arg2[%c0_1, %c0_2] : memref<128x32xf32, #tpu.memory_space<vmem>>, vector<128x32xf32>
    %c0_3 = arith.constant 0 : index
    %c0_4 = arith.constant 0 : index
    %2 = vector.load %arg3[%c0_3, %c0_4] : memref<128x32xf32, #tpu.memory_space<vmem>>, vector<128x32xf32>
    %c0_5 = arith.constant 0 : index
    %c0_6 = arith.constant 0 : index
    %3 = vector.load %arg4[%c0_5, %c0_6] : memref<8x1xi32, #tpu.memory_space<vmem>>, vector<8x1xi32>
    %cst = arith.constant 0.000000e+00 : f32
    %4 = vector.broadcast %cst : f32 to vector<128x32xf32>
    %5 = arith.subf %4, %2 : vector<128x32xf32>
    %6 = math.exp %5 : vector<128x32xf32>
    %7 = arith.mulf %1, %6 : vector<128x32xf32>
    %8 = arith.mulf %1, %1 : vector<128x32xf32>
    %9 = arith.mulf %0, %0 : vector<8x32xf32>
    %cst_7 = arith.constant 1.000000e+00 : f32
    %10 = vector.broadcast %cst_7 : f32 to vector<1x32xf32>
    %11 = arith.mulf %8, %6 : vector<128x32xf32>
    %12 = tpu.concatenate %11, %2, %8 in 0 : vector<128x32xf32>, vector<128x32xf32>, vector<128x32xf32> -> vector<384x32xf32>
    %cst_8 = arith.constant dense<0.000000e+00> : vector<1x384xf32>
    %13 = tpu.matmul %10, %12, %cst_8 {dimension_numbers = #tpu.dot_dimension_numbers<[1], [1], [0], [0], [0, 0, 1, 0], [], []>} : vector<1x32xf32>, vector<384x32xf32>, vector<1x384xf32> -> vector<1x384xf32>
    %14 = vector.extract_strided_slice %13 {offsets = [0, 0], sizes = [1, 128], strides = [1, 1]} : vector<1x384xf32> to vector<1x128xf32>
    %15 = vector.extract_strided_slice %13 {offsets = [0, 128], sizes = [1, 128], strides = [1, 1]} : vector<1x384xf32> to vector<1x128xf32>
    %16 = vector.extract_strided_slice %13 {offsets = [0, 256], sizes = [1, 128], strides = [1, 1]} : vector<1x384xf32> to vector<1x128xf32>
    %17 = tpu.concatenate %7, %1 in 0 : vector<128x32xf32>, vector<128x32xf32> -> vector<256x32xf32>
    %cst_9 = arith.constant dense<0.000000e+00> : vector<8x256xf32>
    %18 = tpu.matmul %0, %17, %cst_9 {dimension_numbers = #tpu.dot_dimension_numbers<[1], [1], [0], [0], [0, 0, 1, 0], [], []>} : vector<8x32xf32>, vector<256x32xf32>, vector<8x256xf32> -> vector<8x256xf32>
    %19 = vector.extract_strided_slice %18 {offsets = [0, 0], sizes = [8, 128], strides = [1, 1]} : vector<8x256xf32> to vector<8x128xf32>
    %20 = vector.extract_strided_slice %18 {offsets = [0, 128], sizes = [8, 128], strides = [1, 1]} : vector<8x256xf32> to vector<8x128xf32>
    %cst_10 = arith.constant dense<0.000000e+00> : vector<8x128xf32>
    %21 = tpu.matmul %9, %6, %cst_10 {dimension_numbers = #tpu.dot_dimension_numbers<[1], [1], [0], [0], [0, 0, 1, 0], [], []>} : vector<8x32xf32>, vector<128x32xf32>, vector<8x128xf32> -> vector<8x128xf32>
    %22 = vector.broadcast %14 : vector<1x128xf32> to vector<8x128xf32>
    %23 = arith.addf %21, %22 : vector<8x128xf32>
    %cst_11 = arith.constant 2.000000e+00 : f32
    %24 = vector.broadcast %cst_11 : f32 to vector<8x128xf32>
    %25 = arith.mulf %24, %19 : vector<8x128xf32>
    %26 = arith.subf %23, %25 : vector<8x128xf32>
    %cst_12 = arith.constant 0.000000e+00 : f32
    %27 = vector.broadcast %cst_12 : f32 to vector<8x128xf32>
    %28 = arith.maximumf %26, %27 : vector<8x128xf32>
    %29 = tpu.iota {dimensions = array<i32: 1>} : vector<8x128xi32>
    %30 = vector.broadcast %3 : vector<8x1xi32> to vector<8x128xi32>
    %31 = arith.cmpi eq, %29, %30 : vector<8x128xi32>
    %32 = arith.extui %31 : vector<8x128xi1> to vector<8x128xi32>
    %33 = arith.sitofp %32 : vector<8x128xi32> to vector<8x128xf32>
    %cst_13 = arith.constant 1.000000e-01 : f32
    %34 = vector.broadcast %cst_13 : f32 to vector<8x128xf32>
    %35 = arith.mulf %34, %33 : vector<8x128xf32>
    %cst_14 = arith.constant 1.000000e+00 : f32
    %36 = vector.broadcast %cst_14 : f32 to vector<8x128xf32>
    %37 = arith.addf %36, %35 : vector<8x128xf32>
    %38 = vector.broadcast %15 : vector<1x128xf32> to vector<8x128xf32>
    %39 = arith.addf %38, %28 : vector<8x128xf32>
    %cst_15 = arith.constant -5.000000e-01 : f32
    %40 = vector.broadcast %cst_15 : f32 to vector<8x128xf32>
    %41 = arith.mulf %40, %39 : vector<8x128xf32>
    %c0_16 = arith.constant 0 : index
    %c0_17 = arith.constant 0 : index
    %42 = vector.load %arg5[%c0_16, %c0_17] : memref<8x128xf32, #tpu.memory_space<vmem>>, vector<8x128xf32>
    tpu.vector_store %arg5[%c0_16, %c0_17], %41 {strides = array<i32>} : memref<8x128xf32, #tpu.memory_space<vmem>>, vector<8x128xf32>,
    %43 = arith.mulf %28, %37 : vector<8x128xf32>
    %44 = vector.broadcast %15 : vector<1x128xf32> to vector<8x128xf32>
    %45 = arith.addf %44, %43 : vector<8x128xf32>
    %cst_18 = arith.constant -5.000000e-01 : f32
    %46 = vector.broadcast %cst_18 : f32 to vector<8x128xf32>
    %47 = arith.mulf %46, %45 : vector<8x128xf32>
    %c0_19 = arith.constant 0 : index
    %c0_20 = arith.constant 0 : index
    %48 = vector.load %arg6[%c0_19, %c0_20] : memref<8x128xf32, #tpu.memory_space<vmem>>, vector<8x128xf32>
    tpu.vector_store %arg6[%c0_19, %c0_20], %47 {strides = array<i32>} : memref<8x128xf32, #tpu.memory_space<vmem>>, vector<8x128xf32>,
    %49 = vector.shape_cast %9 : vector<8x32xf32> to vector<1x8x32xf32>
    %cst_21 = arith.constant dense<0.000000e+00> : vector<1xf32>
    %50 = vector.multi_reduction <add>, %49, %cst_21 [1, 2] : vector<1x8x32xf32> to vector<1xf32>
    %51 = vector.shape_cast %50 : vector<1xf32> to vector<1x1x1xf32>
    %52 = vector.extract %51[0, 0, 0] : f32 from vector<1x1x1xf32>
    %53 = vector.broadcast %52 : f32 to vector<1x1xf32>
    %54 = vector.broadcast %16 : vector<1x128xf32> to vector<8x128xf32>
    %55 = arith.mulf %33, %54 : vector<8x128xf32>
    %56 = vector.shape_cast %55 : vector<8x128xf32> to vector<1x8x128xf32>
    %cst_22 = arith.constant dense<0.000000e+00> : vector<1xf32>
    %57 = vector.multi_reduction <add>, %56, %cst_22 [1, 2] : vector<1x8x128xf32> to vector<1xf32>
    %58 = vector.shape_cast %57 : vector<1xf32> to vector<1x1x1xf32>
    %59 = vector.extract %58[0, 0, 0] : f32 from vector<1x1x1xf32>
    %60 = vector.broadcast %59 : f32 to vector<1x1xf32>
    %61 = arith.addf %53, %60 : vector<1x1xf32>
    %62 = arith.mulf %33, %20 : vector<8x128xf32>
    %63 = vector.shape_cast %62 : vector<8x128xf32> to vector<1x8x128xf32>
    %cst_23 = arith.constant dense<0.000000e+00> : vector<1xf32>
    %64 = vector.multi_reduction <add>, %63, %cst_23 [1, 2] : vector<1x8x128xf32> to vector<1xf32>
    %65 = vector.shape_cast %64 : vector<1xf32> to vector<1x1x1xf32>
    %66 = vector.extract %65[0, 0, 0] : f32 from vector<1x1x1xf32>
    %67 = vector.broadcast %66 : f32 to vector<1x1xf32>
    %cst_24 = arith.constant 2.000000e+00 : f32
    %68 = vector.broadcast %cst_24 : f32 to vector<1x1xf32>
    %69 = arith.mulf %68, %67 : vector<1x1xf32>
    %70 = arith.subf %61, %69 : vector<1x1xf32>
    %cst_25 = arith.constant 5.000000e-01 : f32
    %71 = vector.broadcast %cst_25 : f32 to vector<1x1xf32>
    %72 = arith.mulf %71, %70 : vector<1x1xf32>
    %cst_26 = arith.constant 0.000000e+00 : f32
    %73 = vector.broadcast %cst_26 : f32 to vector<1x1xf32>
    %74 = arith.maximumf %72, %73 : vector<1x1xf32>
    %75 = vector.broadcast %15 : vector<1x128xf32> to vector<8x128xf32>
    %76 = arith.mulf %33, %75 : vector<8x128xf32>
    %77 = vector.shape_cast %76 : vector<8x128xf32> to vector<1x8x128xf32>
    %cst_27 = arith.constant dense<0.000000e+00> : vector<1xf32>
    %78 = vector.multi_reduction <add>, %77, %cst_27 [1, 2] : vector<1x8x128xf32> to vector<1xf32>
    %79 = vector.shape_cast %78 : vector<1xf32> to vector<1x1x1xf32>
    %80 = vector.extract %79[0, 0, 0] : f32 from vector<1x1x1xf32>
    %81 = vector.broadcast %80 : f32 to vector<1x1xf32>
    %cst_28 = arith.constant 5.000000e-01 : f32
    %82 = vector.broadcast %cst_28 : f32 to vector<1x1xf32>
    %83 = arith.mulf %82, %81 : vector<1x1xf32>
    %84 = arith.addf %74, %83 : vector<1x1xf32>
    %85 = vector.shape_cast %84 : vector<1x1xf32> to vector<1x1x1xf32>
    %c0_29 = arith.constant 0 : index
    %c0_30 = arith.constant 0 : index
    %c0_31 = arith.constant 0 : index
    %86 = vector.load %arg7[%c0_29, %c0_30, %c0_31] : memref<1x1x1xf32, #tpu.memory_space<vmem>>, vector<1x1x1xf32>
    tpu.vector_store %arg7[%c0_29, %c0_30, %c0_31], %85 {strides = array<i32>} : memref<1x1x1xf32, #tpu.memory_space<vmem>>, vector<1x1x1xf32>,
    return
  }
  func.func @transform_0(%arg0: i32) -> (i32, i32) {
    %c0_i32 = arith.constant 0 : i32
    %c0_i32_0 = arith.constant 0 : i32
    return %arg0, %c0_i32 : i32, i32
  }
  func.func @transform_1(%arg0: i32) -> (i32, i32) {
    %c0_i32 = arith.constant 0 : i32
    %c0_i32_0 = arith.constant 0 : i32
    %c0_i32_1 = arith.constant 0 : i32
    return %c0_i32, %c0_i32_0 : i32, i32
  }
  func.func @transform_2(%arg0: i32) -> (i32, i32) {
    %c0_i32 = arith.constant 0 : i32
    %c0_i32_0 = arith.constant 0 : i32
    %c0_i32_1 = arith.constant 0 : i32
    return %c0_i32, %c0_i32_0 : i32, i32
  }
  func.func @transform_3(%arg0: i32) -> (i32, i32) {
    %c0_i32 = arith.constant 0 : i32
    %c0_i32_0 = arith.constant 0 : i32
    return %arg0, %c0_i32 : i32, i32
  }
  func.func @transform_4(%arg0: i32) -> (i32, i32) {
    %c0_i32 = arith.constant 0 : i32
    %c0_i32_0 = arith.constant 0 : i32
    return %arg0, %c0_i32 : i32, i32
  }
  func.func @transform_5(%arg0: i32) -> (i32, i32) {
    %c0_i32 = arith.constant 0 : i32
    %c0_i32_0 = arith.constant 0 : i32
    return %arg0, %c0_i32 : i32, i32
  }
  func.func @transform_6(%arg0: i32) -> (i32, i32, i32) {
    %c0_i32 = arith.constant 0 : i32
    %c0_i32_0 = arith.constant 0 : i32
    %c0_i32_1 = arith.constant 0 : i32
    return %arg0, %c0_i32, %c0_i32_0 : i32, i32, i32
  }
}

</mosaic_0001>

<llo_original>
// kernel: tpu_custom_call.1
$region0: #{tpu_custom_call.1}
  #allocation0 [shape = 'u32[]', space=smem, size = 0x4, offset = 0x4, fixed_abs, tag = 'smem constant byte address 0x4 - core index']
  #allocation1 [shape = 'u32[144,128]{1,0:T(1,128)}', space=vmem, size = 0x12000, scoped, tag = 'internal scratch']
  %s0 = inlined_call_operand.vmem [shape: f32[8,32], index: 0, kind: input, shape index: {}]
  %s1 = inlined_call_operand.vmem [shape: f32[128,32], index: 1, kind: input, shape index: {}]
  %s2 = inlined_call_operand.vmem [shape: f32[128,32], index: 2, kind: input, shape index: {}]
  %s3 = inlined_call_operand.vmem [shape: s32[8,1], index: 3, kind: input, shape index: {}]
  %s4 = inlined_call_operand.hbm [shape: f32[8,128], index: 4, kind: output, shape index: {0}]
  %s5 = inlined_call_operand.hbm [shape: f32[8,128], index: 5, kind: output, shape index: {1}]
  %s6 = inlined_call_operand.hbm [shape: f32[1,1,1], index: 6, kind: output, shape index: {2}]
  %7 = xla_tuple %s4, %s5, %s6
  %s8 = sld [smem:[#allocation0]]
  $region42: #{tpu_custom_call.1} parent=0
    _
  %s10 = ssub.s32 1, %s8
  %s11 = scalar_select 0, %s10, %s8
  $region1: #{tpu_custom_call.1} parent=0
    #allocation2 [shape = 'u8[4096]{0}', space=vmem, size = 0x1000, scoped, tag = 'output window, operand 0, single buffered']
    #allocation3 [shape = 's32[1]{0}', space=sflag, size = 0x4, scoped, tag = 'scoped memory for tpu_custom_call.1']
    #allocation4 [shape = 'u8[4096]{0}', space=vmem, size = 0x1000, scoped, tag = 'output window, operand 1, single buffered']
    #allocation5 [shape = 's32[1]{0}', space=sflag, size = 0x4, scoped, tag = 'scoped memory for tpu_custom_call.1']
    #allocation6 [shape = 'u8[512]{0}', space=vmem, size = 0x400, scoped, tag = 'output window, operand 2, single buffered']
    %12 = vsyncpa [#allocation3], 0
    %13 = vsyncpa [#allocation5], 0
    // Predicated region
    $region2: #{tpu_custom_call.1} parent=1 // pred_check
      _
    $region3: #{tpu_custom_call.1} parent=1 // pred_check_branch
      %15 = sbr.rel (0) target = $region5
    $region4: #{tpu_custom_call.1} parent=1 // pred_region
      _
    $region5: #{tpu_custom_call.1} parent=1 // pred_fallthru
      _
    // Predicated region
    $region6: #{tpu_custom_call.1} parent=1 // pred_check
      _
    $region7: #{tpu_custom_call.1} parent=1 // pred_check_branch
      %17 = sbr.rel (0) target = $region9
    $region8: #{tpu_custom_call.1} parent=1 // pred_region
      _
    $region9: #{tpu_custom_call.1} parent=1 // pred_fallthru
      _
    // Predicated region
    $region10: #{tpu_custom_call.1} parent=1 // pred_check
      _
    $region11: #{tpu_custom_call.1} parent=1 // pred_check_branch
      %19 = sbr.rel (0) target = $region13
    $region12: #{tpu_custom_call.1} parent=1 // pred_region
      _
    $region13: #{tpu_custom_call.1} parent=1 // pred_fallthru
      _
    // Predicated region
    $region14: #{tpu_custom_call.1} parent=1 // pred_check
      _
    $region15: #{tpu_custom_call.1} parent=1 // pred_check_branch
      %21 = sbr.rel (0) target = $region17
    $region16: #{tpu_custom_call.1} parent=1 // pred_region
      _
    $region17: #{tpu_custom_call.1} parent=1 // pred_fallthru
      _
    %v22 = vld [vmem:[%s0] sm:$0xff]
    %v23 = vld [vmem:[%s1] sm:$0xff]
    %v24 = vld [vmem:[%s1 + $0x8] sm:$0xff]
    %v25 = vld [vmem:[%s1 + $0x10] sm:$0xff]
    %v26 = vld [vmem:[%s1 + $0x18] sm:$0xff]
    %v27 = vld [vmem:[%s1 + $0x20] sm:$0xff]
    %v28 = vld [vmem:[%s1 + $0x28] sm:$0xff]
    %v29 = vld [vmem:[%s1 + $0x30] sm:$0xff]
    %v30 = vld [vmem:[%s1 + $0x38] sm:$0xff]
    %v31 = vld [vmem:[%s1 + $0x40] sm:$0xff]
    %v32 = vld [vmem:[%s1 + $0x48] sm:$0xff]
    %v33 = vld [vmem:[%s1 + $0x50] sm:$0xff]
    %v34 = vld [vmem:[%s1 + $0x58] sm:$0xff]
    %v35 = vld [vmem:[%s1 + $0x60] sm:$0xff]
    %v36 = vld [vmem:[%s1 + $0x68] sm:$0xff]
    %v37 = vld [vmem:[%s1 + $0x70] sm:$0xff]
    %v38 = vld [vmem:[%s1 + $0x78] sm:$0xff]
    %v39 = vld [vmem:[%s2] sm:$0xff]
    %v40 = vld [vmem:[%s2 + $0x8] sm:$0xff]
    %v41 = vld [vmem:[%s2 + $0x10] sm:$0xff]
    %v42 = vld [vmem:[%s2 + $0x18] sm:$0xff]
    %v43 = vld [vmem:[%s2 + $0x20] sm:$0xff]
    %v44 = vld [vmem:[%s2 + $0x28] sm:$0xff]
    %v45 = vld [vmem:[%s2 + $0x30] sm:$0xff]
    %v46 = vld [vmem:[%s2 + $0x38] sm:$0xff]
    %v47 = vld [vmem:[%s2 + $0x40] sm:$0xff]
    %v48 = vld [vmem:[%s2 + $0x48] sm:$0xff]
    %v49 = vld [vmem:[%s2 + $0x50] sm:$0xff]
    %v50 = vld [vmem:[%s2 + $0x58] sm:$0xff]
    %v51 = vld [vmem:[%s2 + $0x60] sm:$0xff]
    %v52 = vld [vmem:[%s2 + $0x68] sm:$0xff]
    %v53 = vld [vmem:[%s2 + $0x70] sm:$0xff]
    %v54 = vld [vmem:[%s2 + $0x78] sm:$0xff]
    %v55 = vld [vmem:[%s3] sm:$0xff]
    %v56 = vsub.f32 0.0, %v39
    %v57 = vsub.f32 0.0, %v40
    %v58 = vsub.f32 0.0, %v41
    %v59 = vsub.f32 0.0, %v42
    %v60 = vsub.f32 0.0, %v43
    %v61 = vsub.f32 0.0, %v44
    %v62 = vsub.f32 0.0, %v45
    %v63 = vsub.f32 0.0, %v46
    %v64 = vsub.f32 0.0, %v47
    %v65 = vsub.f32 0.0, %v48
    %v66 = vsub.f32 0.0, %v49
    %v67 = vsub.f32 0.0, %v50
    %v68 = vsub.f32 0.0, %v51
    %v69 = vsub.f32 0.0, %v52
    %v70 = vsub.f32 0.0, %v53
    %v71 = vsub.f32 0.0, %v54
    %v72 = vmul.f32 %v56, 1.442695
    %v73 = vpow.pop %v72
    %v74 = vmul.f32 %v57, 1.442695
    %v75 = vpow.pop %v74
    %v76 = vmul.f32 %v58, 1.442695
    %v77 = vpow.pop %v76
    %v78 = vmul.f32 %v59, 1.442695
    %v79 = vpow.pop %v78
    %v80 = vmul.f32 %v60, 1.442695
    %v81 = vpow.pop %v80
    %v82 = vmul.f32 %v61, 1.442695
    %v83 = vpow.pop %v82
    %v84 = vmul.f32 %v62, 1.442695
    %v85 = vpow.pop %v84
    %v86 = vmul.f32 %v63, 1.442695
    %v87 = vpow.pop %v86
    %v88 = vmul.f32 %v64, 1.442695
    %v89 = vpow.pop %v88
    %v90 = vmul.f32 %v65, 1.442695
    %v91 = vpow.pop %v90
    %v92 = vmul.f32 %v66, 1.442695
    %v93 = vpow.pop %v92
    %v94 = vmul.f32 %v67, 1.442695
    %v95 = vpow.pop %v94
    %v96 = vmul.f32 %v68, 1.442695
    %v97 = vpow.pop %v96
    %v98 = vmul.f32 %v69, 1.442695
    %v99 = vpow.pop %v98
    %v100 = vmul.f32 %v70, 1.442695
    %v101 = vpow.pop %v100
    %v102 = vmul.f32 %v71, 1.442695
    %v103 = vpow.pop %v102
    %v104 = vmul.f32 %v23, %v73
    %v105 = vmul.f32 %v24, %v75
    %v106 = vmul.f32 %v25, %v77
    %v107 = vmul.f32 %v26, %v79
    %v108 = vmul.f32 %v27, %v81
    %v109 = vmul.f32 %v28, %v83
    %v110 = vmul.f32 %v29, %v85
    %v111 = vmul.f32 %v30, %v87
    %v112 = vmul.f32 %v31, %v89
    %v113 = vmul.f32 %v32, %v91
    %v114 = vmul.f32 %v33, %v93
    %v115 = vmul.f32 %v34, %v95
    %v116 = vmul.f32 %v35, %v97
    %v117 = vmul.f32 %v36, %v99
    %v118 = vmul.f32 %v37, %v101
    %v119 = vmul.f32 %v38, %v103
    %v120 = vmul.f32 %v23, %v23
    %v121 = vmul.f32 %v24, %v24
    %v122 = vmul.f32 %v25, %v25
    %v123 = vmul.f32 %v26, %v26
    %v124 = vmul.f32 %v27, %v27
    %v125 = vmul.f32 %v28, %v28
    %v126 = vmul.f32 %v29, %v29
    %v127 = vmul.f32 %v30, %v30
    %v128 = vmul.f32 %v31, %v31
    %v129 = vmul.f32 %v32, %v32
    %v130 = vmul.f32 %v33, %v33
    %v131 = vmul.f32 %v34, %v34
    %v132 = vmul.f32 %v35, %v35
    %v133 = vmul.f32 %v36, %v36
    %v134 = vmul.f32 %v37, %v37
    %v135 = vmul.f32 %v38, %v38
    %v136 = vmul.f32 %v22, %v22
    %v137 = vmul.f32 %v120, %v73
    %v138 = vmul.f32 %v121, %v75
    %v139 = vmul.f32 %v122, %v77
    %v140 = vmul.f32 %v123, %v79
    %v141 = vmul.f32 %v124, %v81
    %v142 = vmul.f32 %v125, %v83
    %v143 = vmul.f32 %v126, %v85
    %v144 = vmul.f32 %v127, %v87
    %v145 = vmul.f32 %v128, %v89
    %v146 = vmul.f32 %v129, %v91
    %v147 = vmul.f32 %v130, %v93
    %v148 = vmul.f32 %v131, %v95
    %v149 = vmul.f32 %v132, %v97
    %v150 = vmul.f32 %v133, %v99
    %v151 = vmul.f32 %v134, %v101
    %v152 = vmul.f32 %v135, %v103
    %vm153 = vcmask 261120
    %v155 = vsel %vm153, 1.0, 0
    %v158 = vsel %vm153, %v137, 0
    %v161 = vsel %vm153, %v138, 0
    %v164 = vsel %vm153, %v139, 0
    %v167 = vsel %vm153, %v140, 0
    %v170 = vsel %vm153, %v141, 0
    %v173 = vsel %vm153, %v142, 0
    %v176 = vsel %vm153, %v143, 0
    %v179 = vsel %vm153, %v144, 0
    %v182 = vsel %vm153, %v145, 0
    %v185 = vsel %vm153, %v146, 0
    %v188 = vsel %vm153, %v147, 0
    %v191 = vsel %vm153, %v148, 0
    %v194 = vsel %vm153, %v149, 0
    %v197 = vsel %vm153, %v150, 0
    %v200 = vsel %vm153, %v151, 0
    %v203 = vsel %vm153, %v152, 0
    %v206 = vsel %vm153, %v39, 0
    %v209 = vsel %vm153, %v40, 0
    %v212 = vsel %vm153, %v41, 0
    %v215 = vsel %vm153, %v42, 0
    %v218 = vsel %vm153, %v43, 0
    %v221 = vsel %vm153, %v44, 0
    %v224 = vsel %vm153, %v45, 0
    %v227 = vsel %vm153, %v46, 0
    %v230 = vsel %vm153, %v47, 0
    %v233 = vsel %vm153, %v48, 0
    %v236 = vsel %vm153, %v49, 0
    %v239 = vsel %vm153, %v50, 0
    %v242 = vsel %vm153, %v51, 0
    %v245 = vsel %vm153, %v52, 0
    %v248 = vsel %vm153, %v53, 0
    %v251 = vsel %vm153, %v54, 0
    %v254 = vsel %vm153, %v120, 0
    %v257 = vsel %vm153, %v121, 0
    %v260 = vsel %vm153, %v122, 0
    %v263 = vsel %vm153, %v123, 0
    %v266 = vsel %vm153, %v124, 0
    %v269 = vsel %vm153, %v125, 0
    %v272 = vsel %vm153, %v126, 0
    %v275 = vsel %vm153, %v127, 0
    %v278 = vsel %vm153, %v128, 0
    %v281 = vsel %vm153, %v129, 0
    %v284 = vsel %vm153, %v130, 0
    %v287 = vsel %vm153, %v131, 0
    %v290 = vsel %vm153, %v132, 0
    %v293 = vsel %vm153, %v133, 0
    %v296 = vsel %vm153, %v134, 0
    %v299 = vsel %vm153, %v135, 0
    %301 = vmatprep.subr.mxu0 0.0
    %302 = vmatpush1.xpose.msra.mxu0 %v158
    %303 = vmatprep.subr.mxu0 0.0
    %304 = vmatpush1.xpose.msra.mxu0 %v161
    %305 = vmatprep.subr.mxu0 0.0
    %306 = vmatpush1.xpose.msra.mxu0 %v164
    %307 = vmatprep.subr.mxu0 0.0
    %308 = vmatpush1.xpose.msra.mxu0 %v167
    %309 = vmatprep.subr.mxu0 0.0
    %310 = vmatpush1.xpose.msra.mxu0 %v170
    %311 = vmatprep.subr.mxu0 0.0
    %312 = vmatpush1.xpose.msra.mxu0 %v173
    %313 = vmatprep.subr.mxu0 0.0
    %314 = vmatpush1.xpose.msra.mxu0 %v176
    %315 = vmatprep.subr.mxu0 0.0
    %316 = vmatpush1.xpose.msra.mxu0 %v179
    %317 = vmatprep.subr.mxu0 0.0
    %318 = vmatpush1.xpose.msra.mxu0 %v182
    %319 = vmatprep.subr.mxu0 0.0
    %320 = vmatpush1.xpose.msra.mxu0 %v185
    %321 = vmatprep.subr.mxu0 0.0
    %322 = vmatpush1.xpose.msra.mxu0 %v188
    %323 = vmatprep.subr.mxu0 0.0
    %324 = vmatpush1.xpose.msra.mxu0 %v191
    %325 = vmatprep.subr.mxu0 0.0
    %326 = vmatpush1.xpose.msra.mxu0 %v194
    %327 = vmatprep.subr.mxu0 0.0
    %328 = vmatpush1.xpose.msra.mxu0 %v197
    %329 = vmatprep.subr.mxu0 0.0
    %330 = vmatpush1.xpose.msra.mxu0 %v200
    %331 = vmatprep.subr.mxu0 0.0
    %332 = vmatpush1.xpose.msra.mxu0 %v203
    %333 = vmatprep.subr.mxu0 0.0
    %334 = vmatpush1.xpose.msra.mxu0 %v206
    %335 = vmatprep.subr.mxu0 0.0
    %336 = vmatpush1.xpose.msra.mxu0 %v209
    %337 = vmatprep.subr.mxu0 0.0
    %338 = vmatpush1.xpose.msra.mxu0 %v212
    %339 = vmatprep.subr.mxu0 0.0
    %340 = vmatpush1.xpose.msra.mxu0 %v215
    %341 = vmatprep.subr.mxu0 0.0
    %342 = vmatpush1.xpose.msra.mxu0 %v218
    %343 = vmatprep.subr.mxu0 0.0
    %344 = vmatpush1.xpose.msra.mxu0 %v221
    %345 = vmatprep.subr.mxu0 0.0
    %346 = vmatpush1.xpose.msra.mxu0 %v224
    %347 = vmatprep.subr.mxu0 0.0
    %348 = vmatpush1.xpose.msra.mxu0 %v227
    %349 = vmatprep.subr.mxu0 0.0
    %350 = vmatpush1.xpose.msra.mxu0 %v230
    %351 = vmatprep.subr.mxu0 0.0
    %352 = vmatpush1.xpose.msra.mxu0 %v233
    %353 = vmatprep.subr.mxu0 0.0
    %354 = vmatpush1.xpose.msra.mxu0 %v236
    %355 = vmatprep.subr.mxu0 0.0
    %356 = vmatpush1.xpose.msra.mxu0 %v239
    %357 = vmatprep.subr.mxu0 0.0
    %358 = vmatpush1.xpose.msra.mxu0 %v242
    %359 = vmatprep.subr.mxu0 0.0
    %360 = vmatpush1.xpose.msra.mxu0 %v245
    %361 = vmatprep.subr.mxu0 0.0
    %362 = vmatpush1.xpose.msra.mxu0 %v248
    %363 = vmatprep.subr.mxu0 0.0
    %364 = vmatpush1.xpose.msra.mxu0 %v251
    %365 = vmatprep.mubr.f32.mxu0 0.0
    %366 = vmatmul.mubr.f32.gmra.mrb[0].mxu0 %v155
    %v367 = vpop.f32.mrb[0].mxu0
    %v368 = vadd.f32 0.0, %v367
    %v369 = vpop.f32.mrb[0].mxu0
    %v370 = vadd.f32 0.0, %v369
    %371 = vdwg.mxu0
    %372 = vmatprep.subr.mxu0 0.0
    %373 = vmatpush1.xpose.msra.mxu0 %v254
    %374 = vmatprep.subr.mxu0 0.0
    %375 = vmatpush1.xpose.msra.mxu0 %v257
    %376 = vmatprep.subr.mxu0 0.0
    %377 = vmatpush1.xpose.msra.mxu0 %v260
    %378 = vmatprep.subr.mxu0 0.0
    %379 = vmatpush1.xpose.msra.mxu0 %v263
    %380 = vmatprep.subr.mxu0 0.0
    %381 = vmatpush1.xpose.msra.mxu0 %v266
    %382 = vmatprep.subr.mxu0 0.0
    %383 = vmatpush1.xpose.msra.mxu0 %v269
    %384 = vmatprep.subr.mxu0 0.0
    %385 = vmatpush1.xpose.msra.mxu0 %v272
    %386 = vmatprep.subr.mxu0 0.0
    %387 = vmatpush1.xpose.msra.mxu0 %v275
    %388 = vmatprep.subr.mxu0 0.0
    %389 = vmatpush1.xpose.msra.mxu0 %v278
    %390 = vmatprep.subr.mxu0 0.0
    %391 = vmatpush1.xpose.msra.mxu0 %v281
    %392 = vmatprep.subr.mxu0 0.0
    %393 = vmatpush1.xpose.msra.mxu0 %v284
    %394 = vmatprep.subr.mxu0 0.0
    %395 = vmatpush1.xpose.msra.mxu0 %v287
    %396 = vmatprep.subr.mxu0 0.0
    %397 = vmatpush1.xpose.msra.mxu0 %v290
    %398 = vmatprep.subr.mxu0 0.0
    %399 = vmatpush1.xpose.msra.mxu0 %v293
    %400 = vmatprep.subr.mxu0 0.0
    %401 = vmatpush1.xpose.msra.mxu0 %v296
    %402 = vmatprep.subr.mxu0 0.0
    %403 = vmatpush1.xpose.msra.mxu0 %v299
    %404 = vmatprep.subr.mxu0 0.0
    %405 = vmatpush1.xpose.msra.mxu0 0.0
    %406 = vmatprep.subr.mxu0 0.0
    %407 = vmatpush1.xpose.msra.mxu0 0.0
    %408 = vmatprep.subr.mxu0 0.0
    %409 = vmatpush1.xpose.msra.mxu0 0.0
    %410 = vmatprep.subr.mxu0 0.0
    %411 = vmatpush1.xpose.msra.mxu0 0.0
    %412 = vmatprep.subr.mxu0 0.0
    %413 = vmatpush1.xpose.msra.mxu0 0.0
    %414 = vmatprep.subr.mxu0 0.0
    %415 = vmatpush1.xpose.msra.mxu0 0.0
    %416 = vmatprep.subr.mxu0 0.0
    %417 = vmatpush1.xpose.msra.mxu0 0.0
    %418 = vmatprep.subr.mxu0 0.0
    %419 = vmatpush1.xpose.msra.mxu0 0.0
    %420 = vmatprep.subr.mxu0 0.0
    %421 = vmatpush1.xpose.msra.mxu0 0.0
    %422 = vmatprep.subr.mxu0 0.0
    %423 = vmatpush1.xpose.msra.mxu0 0.0
    %424 = vmatprep.subr.mxu0 0.0
    %425 = vmatpush1.xpose.msra.mxu0 0.0
    %426 = vmatprep.subr.mxu0 0.0
    %427 = vmatpush1.xpose.msra.mxu0 0.0
    %428 = vmatprep.subr.mxu0 0.0
    %429 = vmatpush1.xpose.msra.mxu0 0.0
    %430 = vmatprep.subr.mxu0 0.0
    %431 = vmatpush1.xpose.msra.mxu0 0.0
    %432 = vmatprep.subr.mxu0 0.0
    %433 = vmatpush1.xpose.msra.mxu0 0.0
    %434 = vmatprep.subr.mxu0 0.0
    %435 = vmatpush1.xpose.msra.mxu0 0.0
    %436 = vmatprep.mubr.f32.mxu0 0.0
    %437 = vmatmul.mubr.f32.gmra.mrb[0].mxu0 %v155
    %v438 = vpop.f32.mrb[0].mxu0
    %v439 = vadd.f32 0.0, %v438
    %v440 = vpop.f32.mrb[0].mxu0
    %441 = vdwg.mxu0
    %v443 = vsel %vm153, %v22, 0
    %v446 = vsel %vm153, %v104, 0
    %v449 = vsel %vm153, %v105, 0
    %v452 = vsel %vm153, %v106, 0
    %v455 = vsel %vm153, %v107, 0
    %v458 = vsel %vm153, %v108, 0
    %v461 = vsel %vm153, %v109, 0
    %v464 = vsel %vm153, %v110, 0
    %v467 = vsel %vm153, %v111, 0
    %v470 = vsel %vm153, %v112, 0
    %v473 = vsel %vm153, %v113, 0
    %v476 = vsel %vm153, %v114, 0
    %v479 = vsel %vm153, %v115, 0
    %v482 = vsel %vm153, %v116, 0
    %v485 = vsel %vm153, %v117, 0
    %v488 = vsel %vm153, %v118, 0
    %v491 = vsel %vm153, %v119, 0
    %v494 = vsel %vm153, %v23, 0
    %v497 = vsel %vm153, %v24, 0
    %v500 = vsel %vm153, %v25, 0
    %v503 = vsel %vm153, %v26, 0
    %v506 = vsel %vm153, %v27, 0
    %v509 = vsel %vm153, %v28, 0
    %v512 = vsel %vm153, %v29, 0
    %v515 = vsel %vm153, %v30, 0
    %v518 = vsel %vm153, %v31, 0
    %v521 = vsel %vm153, %v32, 0
    %v524 = vsel %vm153, %v33, 0
    %v527 = vsel %vm153, %v34, 0
    %v530 = vsel %vm153, %v35, 0
    %v533 = vsel %vm153, %v36, 0
    %v536 = vsel %vm153, %v37, 0
    %v539 = vsel %vm153, %v38, 0
    %541 = vmatprep.subr.mxu0 0.0
    %542 = vmatpush1.xpose.msra.mxu0 %v446
    %543 = vmatprep.subr.mxu0 0.0
    %544 = vmatpush1.xpose.msra.mxu0 %v449
    %545 = vmatprep.subr.mxu0 0.0
    %546 = vmatpush1.xpose.msra.mxu0 %v452
    %547 = vmatprep.subr.mxu0 0.0
    %548 = vmatpush1.xpose.msra.mxu0 %v455
    %549 = vmatprep.subr.mxu0 0.0
    %550 = vmatpush1.xpose.msra.mxu0 %v458
    %551 = vmatprep.subr.mxu0 0.0
    %552 = vmatpush1.xpose.msra.mxu0 %v461
    %553 = vmatprep.subr.mxu0 0.0
    %554 = vmatpush1.xpose.msra.mxu0 %v464
    %555 = vmatprep.subr.mxu0 0.0
    %556 = vmatpush1.xpose.msra.mxu0 %v467
    %557 = vmatprep.subr.mxu0 0.0
    %558 = vmatpush1.xpose.msra.mxu0 %v470
    %559 = vmatprep.subr.mxu0 0.0
    %560 = vmatpush1.xpose.msra.mxu0 %v473
    %561 = vmatprep.subr.mxu0 0.0
    %562 = vmatpush1.xpose.msra.mxu0 %v476
    %563 = vmatprep.subr.mxu0 0.0
    %564 = vmatpush1.xpose.msra.mxu0 %v479
    %565 = vmatprep.subr.mxu0 0.0
    %566 = vmatpush1.xpose.msra.mxu0 %v482
    %567 = vmatprep.subr.mxu0 0.0
    %568 = vmatpush1.xpose.msra.mxu0 %v485
    %569 = vmatprep.subr.mxu0 0.0
    %570 = vmatpush1.xpose.msra.mxu0 %v488
    %571 = vmatprep.subr.mxu0 0.0
    %572 = vmatpush1.xpose.msra.mxu0 %v491
    %573 = vmatprep.subr.mxu0 0.0
    %574 = vmatpush1.xpose.msra.mxu0 %v494
    %575 = vmatprep.subr.mxu0 0.0
    %576 = vmatpush1.xpose.msra.mxu0 %v497
    %577 = vmatprep.subr.mxu0 0.0
    %578 = vmatpush1.xpose.msra.mxu0 %v500
    %579 = vmatprep.subr.mxu0 0.0
    %580 = vmatpush1.xpose.msra.mxu0 %v503
    %581 = vmatprep.subr.mxu0 0.0
    %582 = vmatpush1.xpose.msra.mxu0 %v506
    %583 = vmatprep.subr.mxu0 0.0
    %584 = vmatpush1.xpose.msra.mxu0 %v509
    %585 = vmatprep.subr.mxu0 0.0
    %586 = vmatpush1.xpose.msra.mxu0 %v512
    %587 = vmatprep.subr.mxu0 0.0
    %588 = vmatpush1.xpose.msra.mxu0 %v515
    %589 = vmatprep.subr.mxu0 0.0
    %590 = vmatpush1.xpose.msra.mxu0 %v518
    %591 = vmatprep.subr.mxu0 0.0
    %592 = vmatpush1.xpose.msra.mxu0 %v521
    %593 = vmatprep.subr.mxu0 0.0
    %594 = vmatpush1.xpose.msra.mxu0 %v524
    %595 = vmatprep.subr.mxu0 0.0
    %596 = vmatpush1.xpose.msra.mxu0 %v527
    %597 = vmatprep.subr.mxu0 0.0
    %598 = vmatpush1.xpose.msra.mxu0 %v530
    %599 = vmatprep.subr.mxu0 0.0
    %600 = vmatpush1.xpose.msra.mxu0 %v533
    %601 = vmatprep.subr.mxu0 0.0
    %602 = vmatpush1.xpose.msra.mxu0 %v536
    %603 = vmatprep.subr.mxu0 0.0
    %604 = vmatpush1.xpose.msra.mxu0 %v539
    %605 = vmatprep.mubr.f32.mxu0 0.0
    %606 = vmatmul.mubr.f32.gmra.mrb[0].mxu0 %v443
    %v607 = vpop.f32.mrb[0].mxu0
    %v608 = vadd.f32 0.0, %v607
    %v609 = vpop.f32.mrb[0].mxu0
    %v610 = vadd.f32 0.0, %v609
    %611 = vdwg.mxu0
    %v612 = vlaneseq
    %v613 = vshrl.u32 %v612, 7
    %v614 = vsub.s32 0, %v613
    %v615 = vrot.slane %v368, %v614
    %v617 = vsel %vm153, %v136, 0
    %v620 = vsel %vm153, %v73, 0
    %v623 = vsel %vm153, %v75, 0
    %v626 = vsel %vm153, %v77, 0
    %v629 = vsel %vm153, %v79, 0
    %v632 = vsel %vm153, %v81, 0
    %v635 = vsel %vm153, %v83, 0
    %v638 = vsel %vm153, %v85, 0
    %v641 = vsel %vm153, %v87, 0
    %v644 = vsel %vm153, %v89, 0
    %v647 = vsel %vm153, %v91, 0
    %v650 = vsel %vm153, %v93, 0
    %v653 = vsel %vm153, %v95, 0
    %v656 = vsel %vm153, %v97, 0
    %v659 = vsel %vm153, %v99, 0
    %v662 = vsel %vm153, %v101, 0
    %v665 = vsel %vm153, %v103, 0
    %667 = vmatprep.subr.mxu0 0.0
    %668 = vmatpush1.xpose.msra.mxu0 %v620
    %669 = vmatprep.subr.mxu0 0.0
    %670 = vmatpush1.xpose.msra.mxu0 %v623
    %671 = vmatprep.subr.mxu0 0.0
    %672 = vmatpush1.xpose.msra.mxu0 %v626
    %673 = vmatprep.subr.mxu0 0.0
    %674 = vmatpush1.xpose.msra.mxu0 %v629
    %675 = vmatprep.subr.mxu0 0.0
    %676 = vmatpush1.xpose.msra.mxu0 %v632
    %677 = vmatprep.subr.mxu0 0.0
    %678 = vmatpush1.xpose.msra.mxu0 %v635
    %679 = vmatprep.subr.mxu0 0.0
    %680 = vmatpush1.xpose.msra.mxu0 %v638
    %681 = vmatprep.subr.mxu0 0.0
    %682 = vmatpush1.xpose.msra.mxu0 %v641
    %683 = vmatprep.subr.mxu0 0.0
    %684 = vmatpush1.xpose.msra.mxu0 %v644
    %685 = vmatprep.subr.mxu0 0.0
    %686 = vmatpush1.xpose.msra.mxu0 %v647
    %687 = vmatprep.subr.mxu0 0.0
    %688 = vmatpush1.xpose.msra.mxu0 %v650
    %689 = vmatprep.subr.mxu0 0.0
    %690 = vmatpush1.xpose.msra.mxu0 %v653
    %691 = vmatprep.subr.mxu0 0.0
    %692 = vmatpush1.xpose.msra.mxu0 %v656
    %693 = vmatprep.subr.mxu0 0.0
    %694 = vmatpush1.xpose.msra.mxu0 %v659
    %695 = vmatprep.subr.mxu0 0.0
    %696 = vmatpush1.xpose.msra.mxu0 %v662
    %697 = vmatprep.subr.mxu0 0.0
    %698 = vmatpush1.xpose.msra.mxu0 %v665
    %699 = vmatprep.subr.mxu0 0.0
    %700 = vmatpush1.xpose.msra.mxu0 0.0
    %701 = vmatprep.subr.mxu0 0.0
    %702 = vmatpush1.xpose.msra.mxu0 0.0
    %703 = vmatprep.subr.mxu0 0.0
    %704 = vmatpush1.xpose.msra.mxu0 0.0
    %705 = vmatprep.subr.mxu0 0.0
    %706 = vmatpush1.xpose.msra.mxu0 0.0
    %707 = vmatprep.subr.mxu0 0.0
    %708 = vmatpush1.xpose.msra.mxu0 0.0
    %709 = vmatprep.subr.mxu0 0.0
    %710 = vmatpush1.xpose.msra.mxu0 0.0
    %711 = vmatprep.subr.mxu0 0.0
    %712 = vmatpush1.xpose.msra.mxu0 0.0
    %713 = vmatprep.subr.mxu0 0.0
    %714 = vmatpush1.xpose.msra.mxu0 0.0
    %715 = vmatprep.subr.mxu0 0.0
    %716 = vmatpush1.xpose.msra.mxu0 0.0
    %717 = vmatprep.subr.mxu0 0.0
    %718 = vmatpush1.xpose.msra.mxu0 0.0
    %719 = vmatprep.subr.mxu0 0.0
    %720 = vmatpush1.xpose.msra.mxu0 0.0
    %721 = vmatprep.subr.mxu0 0.0
    %722 = vmatpush1.xpose.msra.mxu0 0.0
    %723 = vmatprep.subr.mxu0 0.0
    %724 = vmatpush1.xpose.msra.mxu0 0.0
    %725 = vmatprep.subr.mxu0 0.0
    %726 = vmatpush1.xpose.msra.mxu0 0.0
    %727 = vmatprep.subr.mxu0 0.0
    %728 = vmatpush1.xpose.msra.mxu0 0.0
    %729 = vmatprep.subr.mxu0 0.0
    %730 = vmatpush1.xpose.msra.mxu0 0.0
    %731 = vmatprep.mubr.f32.mxu0 0.0
    %732 = vmatmul.mubr.f32.gmra.mrb[0].mxu0 %v617
    %v733 = vpop.f32.mrb[0].mxu0
    %v734 = vadd.f32 %v615, %v733
    %v735 = vpop.f32.mrb[0].mxu0
    %736 = vdwg.mxu0
    %v737 = vmul.f32 %v608, 2.0
    %v738 = vsub.f32 %v734, %v737
    %v739 = vmax.f32 %v738, 0.0
    %v740 = vlaneseq
    %v741 = vand.u32 %v740, 127
    %742 = vset.pattern.permute.xlu0 0
    %743 = vperm.xlu0 %742, %v55
    %v744 = vpop.permute.xlu0 %743
    %vm745 = vcmp.eq.s32.totalorder %v741, %v744
    %v746 = vsel %vm745, 1, 0
    %v747 = vcvt.s32.f32 %v746
    %v748 = vmul.f32 %v747, 0.1
    %v749 = vadd.f32 %v748, 1.0
    %v750 = vlaneseq
    %v751 = vshrl.u32 %v750, 7
    %v752 = vsub.s32 0, %v751
    %v753 = vrot.slane %v370, %v752
    %v754 = vadd.f32 %v753, %v739
    %v755 = vmul.f32 %v754, -0.5
    %756 = vst [vmem:[#allocation2] sm:$0xff] %v755
    %v757 = vmul.f32 %v739, %v749
    %v758 = vadd.f32 %v753, %v757
    %v759 = vmul.f32 %v758, -0.5
    %760 = vst [vmem:[#allocation4] sm:$0xff] %v759
    %v761 = vsel %vm153, %v136, 0.0
    %762 = vadd.xlane.f32.xlu0 %v761
    %v763 = vpop.xlane.xlu0 %762
    %v764 = vrot.slane %v763, 4
    %v765 = vadd.f32 %v763, %v764
    %v766 = vrot.slane %v765, 2
    %v767 = vadd.f32 %v765, %v766
    %v768 = vrot.slane %v767, 1
    %v769 = vadd.f32 %v767, %v768
    %s770 = vtos %v769
    %v771 = vstv %s770
    %v772 = vlaneseq
    %v773 = vshrl.u32 %v772, 7
    %v774 = vsub.s32 0, %v773
    %v775 = vrot.slane %v439, %v774
    %v776 = vmul.f32 %v747, %v775
    %777 = vadd.xlane.f32.xlu0 %v776
    %v778 = vpop.xlane.xlu0 %777
    %v779 = vrot.slane %v778, 4
    %v780 = vadd.f32 %v778, %v779
    %v781 = vrot.slane %v780, 2
    %v782 = vadd.f32 %v780, %v781
    %v783 = vrot.slane %v782, 1
    %v784 = vadd.f32 %v782, %v783
    %s785 = vtos %v784
    %v786 = vstv %s785
    %v787 = vadd.f32 %v771, %v786
    %v788 = vmul.f32 %v747, %v610
    %789 = vadd.xlane.f32.xlu0 %v788
    %v790 = vpop.xlane.xlu0 %789
    %v791 = vrot.slane %v790, 4
    %v792 = vadd.f32 %v790, %v791
    %v793 = vrot.slane %v792, 2
    %v794 = vadd.f32 %v792, %v793
    %v795 = vrot.slane %v794, 1
    %v796 = vadd.f32 %v794, %v795
    %s797 = vtos %v796
    %v798 = vstv %s797
    %v799 = vmul.f32 %v798, 2.0
    %v800 = vsub.f32 %v787, %v799
    %v801 = vmul.f32 %v800, 0.5
    %v802 = vmax.f32 %v801, 0.0
    %v803 = vmul.f32 %v747, %v753
    %804 = vadd.xlane.f32.xlu0 %v803
    %v805 = vpop.xlane.xlu0 %804
    %v806 = vrot.slane %v805, 4
    %v807 = vadd.f32 %v805, %v806
    %v808 = vrot.slane %v807, 2
    %v809 = vadd.f32 %v807, %v808
    %v810 = vrot.slane %v809, 1
    %v811 = vadd.f32 %v809, %v810
    %s812 = vtos %v811
    %v813 = vstv %s812
    %v814 = vmul.f32 %v813, 0.5
    %v815 = vadd.f32 %v802, %v814
    %vm816 = vcmask 0
    %817 = vst.msk [vmem:[#allocation6] sm:$0x1] %vm816, %v815
    // Predicated region
    $region18: #{tpu_custom_call.1} parent=1 // pred_check
      _
    $region19: #{tpu_custom_call.1} parent=1 // pred_check_branch
      %819 = sbr.rel (0) target = $region21
    $region20: #{tpu_custom_call.1} parent=1 // pred_region
      %s821 = ssub.s32 128, 128
      %822 = vsyncadd [#allocation3], %s821
      %s824 = sshll.u32 [#allocation2], 4
      %s825 = int_to_ptr.vmem [resolvable:$true] %s824
      %827 = dma.vmem_to_hbm [thread:$0]  %s825, 128, %s4, [#allocation3]
    $region21: #{tpu_custom_call.1} parent=1 // pred_fallthru
      _
    // Predicated region
    $region22: #{tpu_custom_call.1} parent=1 // pred_check
      _
    $region23: #{tpu_custom_call.1} parent=1 // pred_check_branch
      %829 = sbr.rel (0) target = $region25
    $region24: #{tpu_custom_call.1} parent=1 // pred_region
      %s831 = ssub.s32 128, 128
      %832 = vsyncadd [#allocation5], %s831
      %s834 = sshll.u32 [#allocation4], 4
      %s835 = int_to_ptr.vmem [resolvable:$true] %s834
      %837 = dma.vmem_to_hbm [thread:$0]  %s835, 128, %s5, [#allocation5]
    $region25: #{tpu_custom_call.1} parent=1 // pred_fallthru
      _
    // Predicated region
    $region26: #{tpu_custom_call.1} parent=1 // pred_check
      _
    $region27: #{tpu_custom_call.1} parent=1 // pred_check_branch
      %839 = sbr.rel (0) target = $region29
    $region28: #{tpu_custom_call.1} parent=1 // pred_region
      %s841 = ssub.s32 16, 16
      %842 = vsyncadd [#allocation5], %s841
      %s844 = sshll.u32 [#allocation6], 4
      %s845 = int_to_ptr.vmem [resolvable:$true] %s844
      %847 = dma.vmem_to_hbm [thread:$0]  %s845, 16, %s6, [#allocation5]
    $region29: #{tpu_custom_call.1} parent=1 // pred_fallthru
      _
    // Predicated region
    $region30: #{tpu_custom_call.1} parent=1 // pred_check
      _
    $region31: #{tpu_custom_call.1} parent=1 // pred_check_branch
      %849 = sbr.rel (0) target = $region33
    $region32: #{tpu_custom_call.1} parent=1 // pred_region
      %850 = dma.done [#allocation3], 128
    $region33: #{tpu_custom_call.1} parent=1 // pred_fallthru
      _
    // Predicated region
    $region34: #{tpu_custom_call.1} parent=1 // pred_check
      _
    $region35: #{tpu_custom_call.1} parent=1 // pred_check_branch
      %852 = sbr.rel (0) target = $region37
    $region36: #{tpu_custom_call.1} parent=1 // pred_region
      %853 = dma.done [#allocation5], 128
    $region37: #{tpu_custom_call.1} parent=1 // pred_fallthru
      _
    // Predicated region
    $region38: #{tpu_custom_call.1} parent=1 // pred_check
      _
    $region39: #{tpu_custom_call.1} parent=1 // pred_check_branch
      %855 = sbr.rel (0) target = $region41
    $region40: #{tpu_custom_call.1} parent=1 // pred_region
      %856 = dma.done [#allocation5], 16
    $region41: #{tpu_custom_call.1} parent=1 // pred_fallthru
      _
    %857 = vsyncpa [#allocation3], 1
    %858 = vsyncpa [#allocation5], 1

</llo_original>
